<compile_context>
chip_gen: v6e
topology: v6e:2x2x1
jax: 0.10.0
libtpu: 0.0.40
codegen_flags: <defaults>
</compile_context>

<pallas_src>
import functools

import jax
import jax.numpy as jnp
from jax import lax
from jax.experimental import pallas as pl
from jax.experimental.pallas import tpu as pltpu


def _rotary_kernel(inv_freq_ref, cos_ref, sin_ref, *, tile_l):
    """inv_freq_ref: (1, C) f32, inv_freq duplicated (== cat([inv, inv])) so it
    already sits in the output lane layout.
    cos_ref / sin_ref: (tile_l, C) output tiles covering rows
    [program_id(0) * tile_l, ...)."""
    row0 = pl.program_id(0) * tile_l
    c = cos_ref.shape[-1]
    # Absolute position of every output element, built directly in the output
    # tile layout (rows = sublanes, channels = lanes) -> no cross-lane relayout.
    pos = (lax.broadcasted_iota(jnp.int32, (tile_l, c), 0) + row0).astype(jnp.float32)
    ang = pos * inv_freq_ref[...]            # (1, C) broadcasts over sublanes
    cos_ref[...] = jnp.cos(ang).astype(cos_ref.dtype)   # cos/sin go to the EUP
    sin_ref[...] = jnp.sin(ang).astype(sin_ref.dtype)


def rotary_cos_sin(seq_len, in_channels, *, base=10000.0, dtype=jnp.float32,
                   row_tile=512):
    """Compute the rotary (cos, sin) tables, each of shape (seq_len, in_channels)."""
    L = int(seq_len)
    C = int(in_channels)

    # inv_freq in f32 (matches torch: arange(0, C, 2).float() / C), duplicated
    # once since cat([freqs, freqs], -1) == outer(t, cat([inv, inv])).
    inv = 1.0 / (float(base) ** (jnp.arange(0, C, 2, dtype=jnp.float32) / C))  # (C//2,)
    inv_full = jnp.concatenate([inv, inv]).reshape(1, C)                        # (1, C)

    # Row tiling: full extent for small L, otherwise 512-row tiles (multiple of
    # 8 sublanes).  512 x 128 x 4 B ~= 256 KiB per output tile -> comfortably
    # inside the scoped VMEM limit on v5e/v6e/v7x even with double buffering.
    tile_l = L if L <= row_tile else row_tile
    grid = (pl.cdiv(L, tile_l),)

    itemsize = jnp.dtype(dtype).itemsize
    cost = pl.CostEstimate(
        flops=L * C,                    # one multiply per element
        transcendentals=2 * L * C,      # cos + sin
        bytes_accessed=2 * L * C * itemsize + C * 4,
    )

    kernel = functools.partial(_rotary_kernel, tile_l=tile_l)

    cos, sin = pl.pallas_call(
        kernel,
        out_shape=(
            jax.ShapeDtypeStruct((L, C), dtype),
            jax.ShapeDtypeStruct((L, C), dtype),
        ),
        grid_spec=pl.GridSpec(
            grid=grid,
            in_specs=[pl.BlockSpec((1, C), lambda i: (0, 0))],   # resident across grid
            out_specs=(
                pl.BlockSpec((tile_l, C), lambda i: (i, 0)),
                pl.BlockSpec((tile_l, C), lambda i: (i, 0)),
            ),
        ),
        compiler_params=pltpu.CompilerParams(
            dimension_semantics=("parallel",),
        ),
        cost_estimate=cost,
    )(inv_full)
    return cos, sin


class RotaryEncoding:
    """Functional mirror of the PyTorch module (cos/sin cache + slicing)."""

    def __init__(self, in_channels, max_len=2048, base=10000):
        self.in_channels = in_channels
        self.max_len = max_len
        self.base = float(base)
        self.cache_len = 0
        self.cos = None
        self.sin = None

    def __call__(self, x, seq_len=None):
        if seq_len > self.cache_len:
            self.cache_len = seq_len
            self.cos, self.sin = rotary_cos_sin(
                seq_len, self.in_channels, base=self.base, dtype=x.dtype
            )
        return (
            self.cos[:seq_len].astype(x.dtype),
            self.sin[:seq_len].astype(x.dtype),
        )


if __name__ == "__main__":
    key = jax.random.PRNGKey(0)

    # Small shapes implied by the module: batch=2, seq=8, in_channels (head dim)=32.
    B, L, C = 2, 8, 32
    x = jax.random.normal(key, (B, L, C), dtype=jnp.float32)

    rope = RotaryEncoding(in_channels=C, max_len=2048, base=10000)
    cos, sin = rope(x, seq_len=L)
    cos, sin = jax.block_until_ready((cos, sin))

    # Pure-JAX reference, identical to the PyTorch module.
    inv_ref = 1.0 / (10000.0 ** (jnp.arange(0, C, 2, dtype=jnp.float32) / C))
    t_ref = jnp.arange(L, dtype=jnp.float32)
    emb_ref = jnp.concatenate([jnp.outer(t_ref, inv_ref)] * 2, axis=-1)
    ref_cos = jnp.cos(emb_ref).astype(x.dtype)
    ref_sin = jnp.sin(emb_ref).astype(x.dtype)

    assert cos.shape == (L, C) and sin.shape == (L, C)
    assert cos.dtype == x.dtype and sin.dtype == x.dtype
    assert jnp.allclose(cos, ref_cos, atol=1e-5, rtol=1e-5)
    assert jnp.allclose(sin, ref_sin, atol=1e-5, rtol=1e-5)

    # Exercise the tiled path once (grid > 1, partial last row-block, bf16 out).
    L2, C2 = 1040, 128
    cos2, sin2 = rotary_cos_sin(L2, C2, dtype=jnp.bfloat16)
    cos2, sin2 = jax.block_until_ready((cos2, sin2))
    inv2 = 1.0 / (10000.0 ** (jnp.arange(0, C2, 2, dtype=jnp.float32) / C2))
    emb2 = jnp.concatenate(
        [jnp.outer(jnp.arange(L2, dtype=jnp.float32), inv2)] * 2, axis=-1
    )
    assert cos2.shape == (L2, C2) and sin2.shape == (L2, C2)
    assert jnp.allclose(cos2.astype(jnp.float32),
                        jnp.cos(emb2).astype(jnp.bfloat16).astype(jnp.float32),
                        atol=2e-2, rtol=2e-2)
    assert jnp.allclose(sin2.astype(jnp.float32),
                        jnp.sin(emb2).astype(jnp.bfloat16).astype(jnp.float32),
                        atol=2e-2, rtol=2e-2)

    print("KERNEL_OK")
</pallas_src>

<mosaic_0001>
module attributes {stable_mosaic.version = 11 : i64} {
  func.func @_rotary_kernel(%arg0: i32, %arg1: memref<1x32xf32, #tpu.memory_space<vmem>>, %arg2: memref<8x32xf32, #tpu.memory_space<vmem>>, %arg3: memref<8x32xf32, #tpu.memory_space<vmem>>) attributes {dimension_semantics = [#tpu.dimension_semantics<parallel>], iteration_bounds = array<i64: 1>, scalar_prefetch = 0 : i64, scratch_operands = 0 : i64, tpu.core_type = #tpu.core_type<tc>, window_params = [{pipeline_mode = #tpu.pipeline_mode<synchronous>, transform_indices = @transform_0, window_bounds = array<i64: 1, 32>}, {transform_indices = @transform_1, window_bounds = array<i64: 8, 32>}, {transform_indices = @transform_2, window_bounds = array<i64: 8, 32>}]} {
    %c8_i32 = arith.constant 8 : i32
    %0 = arith.muli %arg0, %c8_i32 : i32
    %1 = tpu.iota {dimensions = array<i32: 0>} : vector<8x32xi32>
    %2 = vector.broadcast %0 : i32 to vector<8x32xi32>
    %3 = arith.addi %1, %2 : vector<8x32xi32>
    %4 = arith.sitofp %3 : vector<8x32xi32> to vector<8x32xf32>
    %c0 = arith.constant 0 : index
    %c0_0 = arith.constant 0 : index
    %5 = vector.load %arg1[%c0, %c0_0] : memref<1x32xf32, #tpu.memory_space<vmem>>, vector<1x32xf32>
    %6 = vector.broadcast %5 : vector<1x32xf32> to vector<8x32xf32>
    %7 = arith.mulf %4, %6 : vector<8x32xf32>
    %8 = math.cos %7 : vector<8x32xf32>
    %c0_1 = arith.constant 0 : index
    %c0_2 = arith.constant 0 : index
    %9 = vector.load %arg2[%c0_1, %c0_2] : memref<8x32xf32, #tpu.memory_space<vmem>>, vector<8x32xf32>
    tpu.vector_store %arg2[%c0_1, %c0_2], %8 {strides = array<i32>} : memref<8x32xf32, #tpu.memory_space<vmem>>, vector<8x32xf32>,
    %10 = math.sin %7 : vector<8x32xf32>
    %c0_3 = arith.constant 0 : index
    %c0_4 = arith.constant 0 : index
    %11 = vector.load %arg3[%c0_3, %c0_4] : memref<8x32xf32, #tpu.memory_space<vmem>>, vector<8x32xf32>
    tpu.vector_store %arg3[%c0_3, %c0_4], %10 {strides = array<i32>} : memref<8x32xf32, #tpu.memory_space<vmem>>, vector<8x32xf32>,
    return
  }
  func.func @transform_0(%arg0: i32) -> (i32, i32) {
    %c0_i32 = arith.constant 0 : i32
    %c0_i32_0 = arith.constant 0 : i32
    %c0_i32_1 = arith.constant 0 : i32
    return %c0_i32, %c0_i32_0 : i32, i32
  }
  func.func @transform_1(%arg0: i32) -> (i32, i32) {
    %c0_i32 = arith.constant 0 : i32
    %c0_i32_0 = arith.constant 0 : i32
    return %arg0, %c0_i32 : i32, i32
  }
  func.func @transform_2(%arg0: i32) -> (i32, i32) {
    %c0_i32 = arith.constant 0 : i32
    %c0_i32_0 = arith.constant 0 : i32
    return %arg0, %c0_i32 : i32, i32
  }
}

</mosaic_0001>

<llo_original>
// kernel: tpu_custom_call.1
$region0: #{tpu_custom_call.1}
  #allocation0 [shape = 'u32[]', space=smem, size = 0x4, offset = 0x4, fixed_abs, tag = 'smem constant byte address 0x4 - core index']
  #allocation1 [shape = 'u32[144,128]{1,0:T(1,128)}', space=vmem, size = 0x12000, scoped, tag = 'internal scratch']
  %s0 = inlined_call_operand.hbm [shape: f32[1,32], index: 0, kind: input, shape index: {}]
  %s1 = inlined_call_operand.hbm [shape: f32[8,32], index: 1, kind: output, shape index: {0}]
  %s2 = inlined_call_operand.hbm [shape: f32[8,32], index: 2, kind: output, shape index: {1}]
  %3 = xla_tuple %s1, %s2
  %s4 = sld [smem:[#allocation0]]
  $region26: #{tpu_custom_call.1} parent=0
    _
  %s6 = ssub.s32 1, %s4
  %s7 = scalar_select 0, %s6, %s4
  $region1: #{tpu_custom_call.1} parent=0
    #allocation2 [shape = 'u8[512]{0}', space=vmem, size = 0x400, scoped, tag = 'input window, operand 0, single buffered']
    #allocation3 [shape = 's32[1]{0}', space=sflag, size = 0x4, scoped, tag = 'scoped memory for tpu_custom_call.1']
    #allocation4 [shape = 's32[1]{0}', space=sflag, size = 0x4, scoped, tag = 'scoped memory for tpu_custom_call.1']
    #allocation5 [shape = 'u8[4096]{0}', space=vmem, size = 0x1000, scoped, tag = 'output window, operand 0, single buffered']
    #allocation6 [shape = 'u8[4096]{0}', space=vmem, size = 0x1000, scoped, tag = 'output window, operand 1, single buffered']
    #allocation7 [shape = 's32[1]{0}', space=sflag, size = 0x4, scoped, tag = 'scoped memory for tpu_custom_call.1']
    %8 = vsyncpa [#allocation3], 0
    %9 = vsyncpa [#allocation4], 0
    %10 = vsyncpa [#allocation7], 0
    // Predicated region
    $region2: #{tpu_custom_call.1} parent=1 // pred_check
      _
    $region3: #{tpu_custom_call.1} parent=1 // pred_check_branch
      %12 = sbr.rel (0) target = $region5
    $region4: #{tpu_custom_call.1} parent=1 // pred_region
      %s14 = ssub.s32 16, 16
      %15 = vsyncadd [#allocation3], %s14
      %s17 = sshll.u32 [#allocation2], 4
      %s18 = int_to_ptr.vmem [resolvable:$true] %s17
      %20 = dma.hbm_to_vmem [thread:$0]  %s0, 16, %s18, [#allocation3]
    $region5: #{tpu_custom_call.1} parent=1 // pred_fallthru
      _
    // Predicated region
    $region6: #{tpu_custom_call.1} parent=1 // pred_check
      _
    $region7: #{tpu_custom_call.1} parent=1 // pred_check_branch
      %22 = sbr.rel (0) target = $region9
    $region8: #{tpu_custom_call.1} parent=1 // pred_region
      %23 = dma.done [#allocation3], 16
    $region9: #{tpu_custom_call.1} parent=1 // pred_fallthru
      _
    %s24 = smul.u32 0, 8
    %v25 = vlaneseq
    %v26 = vshrl.u32 %v25, 7
    %v27 = vstv %s24
    %v28 = vadd.s32 %v26, %v27
    %v29 = vcvt.s32.f32 %v28
    %v30 = vld [vmem:[#allocation2] sm:$0x1]
    %v32 = vlaneseq
    %v33 = vshrl.u32 %v32, 7
    %v34 = vsub.s32 0, %v33
    %v35 = vrot.slane %v30, %v34
    %v37 = vmul.f32 %v29, %v35
    %v38 = vand.u32 2147483647, %v37
    %vm39 = vcmp.le.f32.partialorder %v38, 0.7853982
    %vm40 = vcmp.lt.s32.totalorder %v37, 0
    %v41 = vand.u32 %v37, 2139095040
    %v42 = vshrl.u32 %v41, 23
    %v43 = vsub.s32 %v42, 127
    %v44 = vand.u32 2147483647, %v37
    %v45 = vand.u32 %v44, 8388607
    %v46 = vor.u32 %v45, 8388608
    %v47 = vsub.s32 0, %v46
    %v48 = vadd.s32 %v43, 1
    %vm49 = vcmp.gt.s32.totalorder %v48, 0
    %v50 = vsel %vm49, %v48, 0
    %v51 = vshrl.u32 %v50, 5
    %v52 = vand.u32 %v50, 31
    %v53 = vsub.s32 32, %v52
    %v54 = vshrl.u32 683565275, %v53
    %v55 = vshll.u32 683565275, %v52
    %v56 = vshrl.u32 2475754826, %v53
    %v57 = vor.u32 %v55, %v56
    %v58 = vshll.u32 2475754826, %v52
    %v59 = vshrl.u32 2131351028, %v53
    %v60 = vor.u32 %v58, %v59
    %v61 = vshll.u32 2131351028, %v52
    %v62 = vshrl.u32 2102212464, %v53
    %v63 = vor.u32 %v61, %v62
    %v64 = vshll.u32 2102212464, %v52
    %v65 = vshrl.u32 920167782, %v53
    %v66 = vor.u32 %v64, %v65
    %v67 = vshll.u32 920167782, %v52
    %v68 = vshrl.u32 1326507024, %v53
    %v69 = vor.u32 %v67, %v68
    %vm70 = vcmp.lt.s32.totalorder %v51, 1
    %vm71 = vcmp.lt.s32.totalorder %v51, 2
    %vm72 = vcmp.lt.s32.totalorder %v51, 3
    %vm73 = vcmp.lt.s32.totalorder %v51, 4
    %v74 = vsel %vm70, %v54, %v57
    %v75 = vsel %vm73, %v63, 2102212464
    %v76 = vsel %vm72, %v60, %v75
    %v77 = vsel %vm71, %v74, %v76
    %v78 = vsel %vm70, %v57, %v60
    %v79 = vsel %vm73, %v66, 920167782
    %v80 = vsel %vm72, %v63, %v79
    %v81 = vsel %vm71, %v78, %v80
    %v82 = vsel %vm70, %v60, %v63
    %v83 = vsel %vm73, %v69, 1326507024
    %v84 = vsel %vm72, %v66, %v83
    %v85 = vsel %vm71, %v82, %v84
    %v86 = vshll.u32 %v46, 8
    %v87 = vmul.u32.u64.compose %v86, %v85
    %v88 = vextract.low.u32 %v87
    %v89 = vextract.high.u32 %v87
    %v90 = vmul.u32.u64.compose %v86, %v81
    %v91 = vextract.low.u32 %v90
    %v92 = vextract.high.u32 %v90
    %v93 = vmul.u32 %v86, %v77
    %v94 = vadd.s32 %v89, %v91
    %vm95 = vc.u32 %v89, %v91
    %v96 = vadd.s32 %v92, 1
    %v97 = vsel %vm95, %v96, %v92
    %v98 = vadd.s32 %v93, %v97
    %v99 = vadd.s32 %v98, 536870912
    %v100 = vshrl.u32 %v99, 30
    %v101 = vshll.u32 %v100, 30
    %v102 = vsub.s32 %v98, %v101
    %vm103 = vcmp.lt.s32.totalorder %v102, 0
    %v104 = vsub.s32 0, %v102
    %v105 = vsel %vm103, %v104, %v102
    %v106 = vclz %v105
    %v107 = vsub.s32 %v106, 2
    %vm108 = vcmp.gt.s32.totalorder 0, %v107
    %v109 = vsel %vm108, 0, %v107
    %v110 = vsub.s32 32, %v109
    %v111 = vshll.u32 %v102, %v109
    %v112 = vshrl.u32 %v94, %v110
    %v113 = vor.u32 %v111, %v112
    %v114 = vsub.s32 4294967266, %v109
    %v115 = vadd.s32 %v114, 127
    %v116 = vshll.u32 %v115, 23
    %v117 = vor.u32 4788187, %v116
    %v118 = vand.u32 2147483647, %v117
    %v120 = vcvt.s32.f32 %v113
    %v121 = vmul.f32 %v120, %v118
    %v122 = vxor.u32 %v121, 2147483648
    %v123 = vsel %vm40, %v122, %v121
    %v124 = vsub.s32 4, %v100
    %v125 = vsel %vm40, %v124, %v100
    %v126 = vsel %vm39, %v37, %v123
    %v127 = vsel %vm39, 0, %v125
    %v128 = vcosq.f32.pop %v126
    %v129 = vsinq.f32.pop %v126
    %vm130 = vweird.f32 %v37
    %v131 = vand.u32 %v127, 3
    %vm132 = vcmp.lt.s32.totalorder %v131, 2
    %vm133 = vcmp.eq.s32.totalorder %v131, 0
    %v134 = vxor.u32 %v129, 2147483648
    %v135 = vsel %vm133, %v128, %v134
    %vm136 = vcmp.eq.s32.totalorder %v131, 2
    %v137 = vxor.u32 %v128, 2147483648
    %v138 = vsel %vm136, %v137, %v129
    %v139 = vsel %vm132, %v135, %v138
    %v140 = vsel %vm130, nan, %v139
    %vm141 = vcmask 261120
    %142 = vst.msk [vmem:[#allocation5] sm:$0xff] %vm141, %v140
    %v143 = vand.u32 2147483647, %v37
    %vm144 = vcmp.le.f32.partialorder %v143, 0.7853982
    %vm145 = vcmp.lt.s32.totalorder %v37, 0
    %v146 = vand.u32 %v37, 2139095040
    %v147 = vshrl.u32 %v146, 23
    %v148 = vsub.s32 %v147, 127
    %v149 = vand.u32 2147483647, %v37
    %v150 = vand.u32 %v149, 8388607
    %v151 = vor.u32 %v150, 8388608
    %v152 = vsub.s32 0, %v151
    %v153 = vadd.s32 %v148, 1
    %vm154 = vcmp.gt.s32.totalorder %v153, 0
    %v155 = vsel %vm154, %v153, 0
    %v156 = vshrl.u32 %v155, 5
    %v157 = vand.u32 %v155, 31
    %v158 = vsub.s32 32, %v157
    %v159 = vshrl.u32 683565275, %v158
    %v160 = vshll.u32 683565275, %v157
    %v161 = vshrl.u32 2475754826, %v158
    %v162 = vor.u32 %v160, %v161
    %v163 = vshll.u32 2475754826, %v157
    %v164 = vshrl.u32 2131351028, %v158
    %v165 = vor.u32 %v163, %v164
    %v166 = vshll.u32 2131351028, %v157
    %v167 = vshrl.u32 2102212464, %v158
    %v168 = vor.u32 %v166, %v167
    %v169 = vshll.u32 2102212464, %v157
    %v170 = vshrl.u32 920167782, %v158
    %v171 = vor.u32 %v169, %v170
    %v172 = vshll.u32 920167782, %v157
    %v173 = vshrl.u32 1326507024, %v158
    %v174 = vor.u32 %v172, %v173
    %vm175 = vcmp.lt.s32.totalorder %v156, 1
    %vm176 = vcmp.lt.s32.totalorder %v156, 2
    %vm177 = vcmp.lt.s32.totalorder %v156, 3
    %vm178 = vcmp.lt.s32.totalorder %v156, 4
    %v179 = vsel %vm175, %v159, %v162
    %v180 = vsel %vm178, %v168, 2102212464
    %v181 = vsel %vm177, %v165, %v180
    %v182 = vsel %vm176, %v179, %v181
    %v183 = vsel %vm175, %v162, %v165
    %v184 = vsel %vm178, %v171, 920167782
    %v185 = vsel %vm177, %v168, %v184
    %v186 = vsel %vm176, %v183, %v185
    %v187 = vsel %vm175, %v165, %v168
    %v188 = vsel %vm178, %v174, 1326507024
    %v189 = vsel %vm177, %v171, %v188
    %v190 = vsel %vm176, %v187, %v189
    %v191 = vshll.u32 %v151, 8
    %v192 = vmul.u32.u64.compose %v191, %v190
    %v193 = vextract.low.u32 %v192
    %v194 = vextract.high.u32 %v192
    %v195 = vmul.u32.u64.compose %v191, %v186
    %v196 = vextract.low.u32 %v195
    %v197 = vextract.high.u32 %v195
    %v198 = vmul.u32 %v191, %v182
    %v199 = vadd.s32 %v194, %v196
    %vm200 = vc.u32 %v194, %v196
    %v201 = vadd.s32 %v197, 1
    %v202 = vsel %vm200, %v201, %v197
    %v203 = vadd.s32 %v198, %v202
    %v204 = vadd.s32 %v203, 536870912
    %v205 = vshrl.u32 %v204, 30
    %v206 = vshll.u32 %v205, 30
    %v207 = vsub.s32 %v203, %v206
    %vm208 = vcmp.lt.s32.totalorder %v207, 0
    %v209 = vsub.s32 0, %v207
    %v210 = vsel %vm208, %v209, %v207
    %v211 = vclz %v210
    %v212 = vsub.s32 %v211, 2
    %vm213 = vcmp.gt.s32.totalorder 0, %v212
    %v214 = vsel %vm213, 0, %v212
    %v215 = vsub.s32 32, %v214
    %v216 = vshll.u32 %v207, %v214
    %v217 = vshrl.u32 %v199, %v215
    %v218 = vor.u32 %v216, %v217
    %v219 = vsub.s32 4294967266, %v214
    %v220 = vadd.s32 %v219, 127
    %v221 = vshll.u32 %v220, 23
    %v222 = vor.u32 4788187, %v221
    %v223 = vand.u32 2147483647, %v222
    %v225 = vcvt.s32.f32 %v218
    %v226 = vmul.f32 %v225, %v223
    %v227 = vxor.u32 %v226, 2147483648
    %v228 = vsel %vm145, %v227, %v226
    %v229 = vsub.s32 4, %v205
    %v230 = vsel %vm145, %v229, %v205
    %v231 = vsel %vm144, %v37, %v228
    %v232 = vsel %vm144, 0, %v230
    %v233 = vcosq.f32.pop %v231
    %v234 = vsinq.f32.pop %v231
    %vm235 = vweird.f32 %v37
    %v236 = vadd.s32 %v232, 3
    %v237 = vand.u32 %v236, 3
    %vm238 = vcmp.lt.s32.totalorder %v237, 2
    %vm239 = vcmp.eq.s32.totalorder %v237, 0
    %v240 = vxor.u32 %v234, 2147483648
    %v241 = vsel %vm239, %v233, %v240
    %vm242 = vcmp.eq.s32.totalorder %v237, 2
    %v243 = vxor.u32 %v233, 2147483648
    %v244 = vsel %vm242, %v243, %v234
    %v245 = vsel %vm238, %v241, %v244
    %v246 = vsel %vm235, nan, %v245
    %247 = vst.msk [vmem:[#allocation6] sm:$0xff] %vm141, %v246
    // Predicated region
    $region10: #{tpu_custom_call.1} parent=1 // pred_check
      _
    $region11: #{tpu_custom_call.1} parent=1 // pred_check_branch
      %249 = sbr.rel (0) target = $region13
    $region12: #{tpu_custom_call.1} parent=1 // pred_region
      %s251 = ssub.s32 128, 128
      %252 = vsyncadd [#allocation4], %s251
      %s254 = sshll.u32 [#allocation5], 4
      %s255 = int_to_ptr.vmem [resolvable:$true] %s254
      %257 = dma.vmem_to_hbm [thread:$0]  %s255, 128, %s1, [#allocation4]
    $region13: #{tpu_custom_call.1} parent=1 // pred_fallthru
      _
    // Predicated region
    $region14: #{tpu_custom_call.1} parent=1 // pred_check
      _
    $region15: #{tpu_custom_call.1} parent=1 // pred_check_branch
      %259 = sbr.rel (0) target = $region17
    $region16: #{tpu_custom_call.1} parent=1 // pred_region
      %s261 = ssub.s32 128, 128
      %262 = vsyncadd [#allocation7], %s261
      %s264 = sshll.u32 [#allocation6], 4
      %s265 = int_to_ptr.vmem [resolvable:$true] %s264
      %267 = dma.vmem_to_hbm [thread:$0]  %s265, 128, %s2, [#allocation7]
    $region17: #{tpu_custom_call.1} parent=1 // pred_fallthru
      _
    // Predicated region
    $region18: #{tpu_custom_call.1} parent=1 // pred_check
      _
    $region19: #{tpu_custom_call.1} parent=1 // pred_check_branch
      %269 = sbr.rel (0) target = $region21
    $region20: #{tpu_custom_call.1} parent=1 // pred_region
      %270 = dma.done [#allocation4], 128
    $region21: #{tpu_custom_call.1} parent=1 // pred_fallthru
      _
    // Predicated region
    $region22: #{tpu_custom_call.1} parent=1 // pred_check
      _
    $region23: #{tpu_custom_call.1} parent=1 // pred_check_branch
      %272 = sbr.rel (0) target = $region25
    $region24: #{tpu_custom_call.1} parent=1 // pred_region
      %273 = dma.done [#allocation7], 128
    $region25: #{tpu_custom_call.1} parent=1 // pred_fallthru
      _
    %274 = vsyncpa [#allocation3], 1
    %275 = vsyncpa [#allocation4], 1
    %276 = vsyncpa [#allocation7], 1

</llo_original>
